<compile_context>
chip_gen: v7x
topology: tpu7x:2x2x1
jax: 0.10.0
libtpu: 0.0.40
codegen_flags: <defaults>
</compile_context>

<pallas_src>
import functools
import math

import jax
import jax.numpy as jnp
from jax.experimental import pallas as pl
from jax.experimental.pallas import tpu as pltpu


_DEFAULT_SINGLE_PASS_MAX_BYTES = 8 * 1024 * 1024   # per-(n) (C, HW) slab bytes
_TILE_TARGET_BYTES = 4 * 1024 * 1024               # two-pass spatial tile bytes
_VMEM_FLOOR_BYTES = 32 * 1024 * 1024
_VMEM_CAP_BYTES = 48 * 1024 * 1024                 # safe on v5e/v6e/v7x


# --------------------------------------------------------------------------- #
# in-kernel helpers
# --------------------------------------------------------------------------- #

def _sigmoid(x):
    # exp lives on the EUP; pl.reciprocal avoids a VALU divide.
    return pl.reciprocal(1.0 + jnp.exp(-x), approx=False)


def _channel_gate(gap_col, w1, b1, w2, b2):
    """cSE gate for one batch element.

    gap_col: (C, 1) f32 global-average-pooled features.
    Returns the (C, 1) f32 channel gate sigmoid(w2 @ relu(w1 @ gap + b1) + b2).

    The column is broadcast to 128 lanes so both tiny matmuls run with a
    native MXU lane dimension (the MXU would pad to 128 lanes anyway).
    """
    c = gap_col.shape[0]
    g = jnp.broadcast_to(gap_col, (c, 128))                        # (C, 128)
    z = jnp.maximum(
        jnp.dot(w1, g, preferred_element_type=jnp.float32) + b1, 0.0)  # (Cmid,128)
    catt = _sigmoid(
        jnp.dot(w2, z, preferred_element_type=jnp.float32) + b2)       # (C, 128)
    return catt[:, 0:1]                                            # (C, 1)


# --------------------------------------------------------------------------- #
# Pallas kernels
# --------------------------------------------------------------------------- #

def _scse_fused_kernel(x_ref, w1_ref, b1_ref, w2_ref, b2_ref, ws_ref, bs_ref,
                       o_ref, *, inv_hw):
    """Single-pass scSE: GAP + cSE MLP + sSE + apply for one batch element.

    x tile: (C, HW) — channels on sublanes, spatial on lanes.
    """
    x = x_ref[0]                                                   # (C, HW)
    xf = x.astype(jnp.float32)

    # Global average pool (spatial = lane axis).
    gap = jnp.sum(xf, axis=-1, keepdims=True) * inv_hw             # (C, 1)

    # cSE channel gate (tiny MXU matmuls).
    catt = _channel_gate(gap, w1_ref[...], b1_ref[...], w2_ref[...], b2_ref[...])

    # sSE spatial gate: (1, C) @ (C, HW) on the MXU, f32 accumulate.
    s_logit = jnp.dot(ws_ref[...], xf,
                      preferred_element_type=jnp.float32) + bs_ref[...]  # (1, HW)
    s = _sigmoid(s_logit)

    # x * cSE + x * sSE == x * (cSE + sSE); multiply in x's native dtype.
    o_ref[0] = x * (catt + s).astype(o_ref.dtype)


def _gap_gate_kernel(x_ref, w1_ref, b1_ref, w2_ref, b2_ref, catt_ref, acc_ref,
                     *, inv_hw):
    """Two-pass kernel A: fused GAP + cSE channel MLP.

    Grid = (N, n_hw); spatial axis is 'arbitrary'; the f32 sum is accumulated
    in a VMEM scratch and the tiny MLP runs only on the last spatial step.
    """
    j = pl.program_id(1)

    @pl.when(j == 0)
    def _():
        acc_ref[...] = jnp.zeros_like(acc_ref)

    acc_ref[...] += jnp.sum(x_ref[0].astype(jnp.float32), axis=-1, keepdims=True)

    @pl.when(j == pl.num_programs(1) - 1)
    def _():
        gap = acc_ref[...] * inv_hw                                # scale once
        catt_ref[0] = _channel_gate(gap, w1_ref[...], b1_ref[...],
                                    w2_ref[...], b2_ref[...])


def _scse_apply_kernel(x_ref, catt_ref, ws_ref, bs_ref, o_ref):
    """Two-pass kernel B: fused sSE (MXU 1x1 conv) + x * (cSE + sSE) apply."""
    x = x_ref[0]                                                   # (C, thw)
    xf = x.astype(jnp.float32)
    catt = catt_ref[0]                                             # (C, 1) f32

    s_logit = jnp.dot(ws_ref[...], xf,
                      preferred_element_type=jnp.float32) + bs_ref[...]  # (1, thw)
    s = _sigmoid(s_logit)

    o_ref[0] = x * (catt + s).astype(o_ref.dtype)


# --------------------------------------------------------------------------- #
# tiling helpers
# --------------------------------------------------------------------------- #

def _pick_spatial_tile(hw, c, itemsize, target_bytes=_TILE_TARGET_BYTES):
    """Largest multiple-of-128 divisor of `hw` with (c, tile) ~<= target bytes.

    `hw` must already be a multiple of 128 (the wrapper pads if needed), so the
    search always terminates at 128.
    """
    assert hw % 128 == 0, hw
    cap = max(1, target_bytes // (c * itemsize * 128)) * 128
    t = max(128, min(hw, cap) - (min(hw, cap) % 128))
    while hw % t != 0:
        t -= 128
    return t


def _vmem_limit_bytes(*block_bytes):
    """Scoped-VMEM limit: double-buffered blocks + margin, clamped to safe range."""
    need = 2 * sum(block_bytes) + (2 << 20)
    return int(min(max(need, _VMEM_FLOOR_BYTES), _VMEM_CAP_BYTES))


# --------------------------------------------------------------------------- #
# modules
# --------------------------------------------------------------------------- #

class SCSEModule:
    """JAX/Pallas port of the scSE attention block used by the UNet decoder."""

    def __init__(self, in_channels, reduction=16, *, key=None, dtype=jnp.float32,
                 single_pass_max_bytes=_DEFAULT_SINGLE_PASS_MAX_BYTES):
        c_mid = in_channels // reduction
        if c_mid < 1:
            raise ValueError(
                "in_channels // reduction must be >= 1 (got {}//{})".format(
                    in_channels, reduction))
        if key is None:
            key = jax.random.PRNGKey(0)
        k1, k2, k3, k4, k5, k6 = jax.random.split(key, 6)

        def _u(k, shape, fan_in):
            b = 1.0 / math.sqrt(fan_in)
            return jax.random.uniform(k, shape, dtype, -b, b)

        # cSE: 1x1 conv (C -> C//r) -> ReLU -> 1x1 conv (C//r -> C) -> sigmoid
        self.w1 = _u(k1, (c_mid, in_channels), in_channels)   # (Cmid, C)
        self.b1 = _u(k2, (c_mid,), in_channels)                # (Cmid,)
        self.w2 = _u(k3, (in_channels, c_mid), c_mid)          # (C, Cmid)
        self.b2 = _u(k4, (in_channels,), c_mid)                # (C,)
        # sSE: 1x1 conv (C -> 1) -> sigmoid
        self.ws = _u(k5, (in_channels,), in_channels)          # (C,)
        self.bs = _u(k6, (), in_channels)                      # ()
        self.in_channels = in_channels
        self.single_pass_max_bytes = single_pass_max_bytes

    # kernel-friendly (2-D, f32) views of the parameters
    def _packed_params(self):
        f32 = jnp.float32
        return (self.w1.astype(f32),                  # (Cmid, C)
                self.b1.reshape(-1, 1).astype(f32),   # (Cmid, 1)
                self.w2.astype(f32),                  # (C, Cmid)
                self.b2.reshape(-1, 1).astype(f32),   # (C, 1)
                self.ws.reshape(1, -1).astype(f32),   # (1, C)
                self.bs.reshape(1, 1).astype(f32))    # (1, 1)

    def __call__(self, x):
        N, C, H, W = x.shape
        assert C == self.in_channels, (C, self.in_channels)
        HW = H * W
        itemsize = jnp.dtype(x.dtype).itemsize
        x3 = x.reshape(N, C, HW)            # free reshape: spatial -> lane axis
        params = self._packed_params()

        slab_bytes = C * HW * itemsize
        if slab_bytes <= self.single_pass_max_bytes:
            out3 = self._single_pass(x3, *params)
        else:
            out3 = self._two_pass(x3, *params, itemsize=itemsize)
        return out3.reshape(N, C, H, W)

    # ---------------- single-pass: GAP + MLP + sSE + apply in one kernel ---- #
    def _single_pass(self, x3, w1, b1, w2, b2, ws, bs):
        N, C, HW = x3.shape
        c_mid = w1.shape[0]
        slab_bytes = C * HW * jnp.dtype(x3.dtype).itemsize
        const = lambda n: (0, 0)
        return pl.pallas_call(
            functools.partial(_scse_fused_kernel, inv_hw=1.0 / HW),
            out_shape=jax.ShapeDtypeStruct((N, C, HW), x3.dtype),
            grid=(N,),
            in_specs=[
                pl.BlockSpec((1, C, HW), lambda n: (n, 0, 0)),   # x slab
                pl.BlockSpec((c_mid, C), const),                 # w1
                pl.BlockSpec((c_mid, 1), const),                 # b1
                pl.BlockSpec((C, c_mid), const),                 # w2
                pl.BlockSpec((C, 1), const),                     # b2
                pl.BlockSpec((1, C), const),                     # ws
                pl.BlockSpec((1, 1), const),                     # bs
            ],
            out_specs=pl.BlockSpec((1, C, HW), lambda n: (n, 0, 0)),
            compiler_params=pltpu.CompilerParams(
                dimension_semantics=("parallel",),
                vmem_limit_bytes=_vmem_limit_bytes(slab_bytes, slab_bytes)),
        )(x3, w1, b1, w2, b2, ws, bs)

    # ---------------- two-pass: (GAP + MLP) then (sSE + apply) -------------- #
    def _two_pass(self, x3, w1, b1, w2, b2, ws, bs, *, itemsize):
        N, C, HW = x3.shape
        c_mid = w1.shape[0]

        # Pad spatial to a multiple of 128 so tiles stay lane-aligned and
        # bounded (zeros contribute nothing to the GAP; padded columns are
        # sliced off after the apply).
        HW_pad = ((HW + 127) // 128) * 128
        if HW_pad != HW:
            # TODO(synk): masked edge tile instead of this extra pad copy for
            # very large non-128-divisible feature maps.
            x3 = jnp.pad(x3, ((0, 0), (0, 0), (0, HW_pad - HW)))

        thw = _pick_spatial_tile(HW_pad, C, itemsize)
        n_hw = HW_pad // thw
        tile_bytes = C * thw * itemsize
        const2 = lambda n, j: (0, 0)

        # ---- pass A: global average pool + cSE MLP (one read of x) -------- #
        catt = pl.pallas_call(
            functools.partial(_gap_gate_kernel, inv_hw=1.0 / HW),
            out_shape=jax.ShapeDtypeStruct((N, C, 1), jnp.float32),
            grid=(N, n_hw),
            in_specs=[
                pl.BlockSpec((1, C, thw), lambda n, j: (n, 0, j)),  # x tile
                pl.BlockSpec((c_mid, C), const2),                   # w1
                pl.BlockSpec((c_mid, 1), const2),                   # b1
                pl.BlockSpec((C, c_mid), const2),                   # w2
                pl.BlockSpec((C, 1), const2),                       # b2
            ],
            out_specs=pl.BlockSpec((1, C, 1), lambda n, j: (n, 0, 0)),
            scratch_shapes=[pltpu.VMEM((C, 1), jnp.float32)],
            compiler_params=pltpu.CompilerParams(
                dimension_semantics=("parallel", "arbitrary"),
                vmem_limit_bytes=_vmem_limit_bytes(tile_bytes)),
        )(x3, w1, b1, w2, b2)

        # ---- pass B: fused sSE + apply (one read + one write of x) -------- #
        out3 = pl.pallas_call(
            _scse_apply_kernel,
            out_shape=jax.ShapeDtypeStruct((N, C, HW_pad), x3.dtype),
            grid=(N, n_hw),
            in_specs=[
                pl.BlockSpec((1, C, thw), lambda n, j: (n, 0, j)),  # x tile
                pl.BlockSpec((1, C, 1), lambda n, j: (n, 0, 0)),    # channel gate
                pl.BlockSpec((1, C), const2),                       # ws
                pl.BlockSpec((1, 1), const2),                       # bs
            ],
            out_specs=pl.BlockSpec((1, C, thw), lambda n, j: (n, 0, j)),
            compiler_params=pltpu.CompilerParams(
                dimension_semantics=("parallel", "parallel"),
                vmem_limit_bytes=_vmem_limit_bytes(tile_bytes, tile_bytes)),
        )(x3, catt, ws, bs)

        if HW_pad != HW:
            out3 = out3[:, :, :HW]
        return out3


class Attention:
    """JAX/Pallas port of the PyTorch `Attention` nn.Module."""

    def __init__(self, name, **params):
        if name is None:
            # nn.Identity: pure pass-through; no kernel needed.
            self.attention = lambda x: x
        elif name == "scse":
            self.attention = SCSEModule(**params)
        else:
            raise ValueError("Attention {} is not implemented".format(name))

    def __call__(self, x):
        return self.attention(x)


# --------------------------------------------------------------------------- #
# main
# --------------------------------------------------------------------------- #

if __name__ == "__main__":
    key = jax.random.PRNGKey(0)
    kx1, kx2, kx3, kp = jax.random.split(key, 4)

    C = 32

    def check_scse(attn, xin, atol=1e-3, rtol=1e-3):
        out = attn(xin)
        jax.block_until_ready(out)
        m = attn.attention
        # Pure-jnp reference with the same parameters (high-precision matmuls
        # so the comparison isolates the kernel, not XLA's default dot mode).
        with jax.default_matmul_precision("highest"):
            gap_ref = jnp.mean(xin, axis=(2, 3))                              # (N, C)
            z_ref = jnp.maximum(gap_ref @ m.w1.T + m.b1, 0.0)
            cse_ref = jax.nn.sigmoid(z_ref @ m.w2.T + m.b2)[:, :, None, None]
            sse_ref = jax.nn.sigmoid(
                jnp.einsum("nchw,c->nhw", xin, m.ws) + m.bs)[:, None]
            ref = xin * cse_ref + xin * sse_ref
        assert out.shape == xin.shape
        err = float(jnp.max(jnp.abs(out - ref)))
        assert jnp.allclose(out, ref, atol=atol, rtol=rtol), err

    # ---- Identity path (name=None) ---------------------------------------- #
    x = jax.random.normal(kx1, (2, C, 16, 16), dtype=jnp.float32)
    ident = Attention(None)(x)
    assert ident.shape == x.shape
    assert bool(jnp.array_equal(ident, x))

    # ---- scSE, single-pass path (slab fits VMEM) --------------------------- #
    attn_sp = Attention("scse", in_channels=C, reduction=8, key=kp)
    check_scse(attn_sp, x)

    # ---- scSE, two-pass path (forced; multi-tile spatial accumulation) ----- #
    attn_tp = Attention("scse", in_channels=C, reduction=8, key=kp,
                        single_pass_max_bytes=0)
    x_big = jax.random.normal(kx2, (2, C, 192, 192), dtype=jnp.float32)
    check_scse(attn_tp, x_big)

    # ---- scSE, two-pass path with non-128-divisible spatial (pad path) ----- #
    x_odd = jax.random.normal(kx3, (1, C, 12, 12), dtype=jnp.float32)
    check_scse(attn_tp, x_odd)

    print("KERNEL_OK")
</pallas_src>

<mosaic_0001>
module attributes {stable_mosaic.version = 11 : i64} {
  func.func @_scse_fused_kernel(%arg0: i32, %arg1: memref<1x32x256xf32, #tpu.memory_space<vmem>>, %arg2: memref<4x32xf32, #tpu.memory_space<vmem>>, %arg3: memref<4x1xf32, #tpu.memory_space<vmem>>, %arg4: memref<32x4xf32, #tpu.memory_space<vmem>>, %arg5: memref<32x1xf32, #tpu.memory_space<vmem>>, %arg6: memref<1x32xf32, #tpu.memory_space<vmem>>, %arg7: memref<1x1xf32, #tpu.memory_space<vmem>>, %arg8: memref<1x32x256xf32, #tpu.memory_space<vmem>>) attributes {dimension_semantics = [#tpu.dimension_semantics<parallel>], iteration_bounds = array<i64: 2>, scalar_prefetch = 0 : i64, scratch_operands = 0 : i64, tpu.core_type = #tpu.core_type<tc>, window_params = [{transform_indices = @transform_0, window_bounds = array<i64: 1, 32, 256>}, {pipeline_mode = #tpu.pipeline_mode<synchronous>, transform_indices = @transform_1, window_bounds = array<i64: 4, 32>}, {pipeline_mode = #tpu.pipeline_mode<synchronous>, transform_indices = @transform_2, window_bounds = array<i64: 4, 1>}, {pipeline_mode = #tpu.pipeline_mode<synchronous>, transform_indices = @transform_3, window_bounds = array<i64: 32, 4>}, {pipeline_mode = #tpu.pipeline_mode<synchronous>, transform_indices = @transform_4, window_bounds = array<i64: 32, 1>}, {pipeline_mode = #tpu.pipeline_mode<synchronous>, transform_indices = @transform_5, window_bounds = array<i64: 1, 32>}, {pipeline_mode = #tpu.pipeline_mode<synchronous>, transform_indices = @transform_6, window_bounds = array<i64: 1, 1>}, {transform_indices = @transform_7, window_bounds = array<i64: 1, 32, 256>}]} {
    %c0 = arith.constant 0 : index
    %c0_0 = arith.constant 0 : index
    %c0_1 = arith.constant 0 : index
    %0 = vector.load %arg1[%c0, %c0_0, %c0_1] : memref<1x32x256xf32, #tpu.memory_space<vmem>>, vector<1x32x256xf32>
    %1 = vector.shape_cast %0 : vector<1x32x256xf32> to vector<32x256xf32>
    %cst = arith.constant dense<0.000000e+00> : vector<32xf32>
    %2 = vector.multi_reduction <add>, %1, %cst [1] : vector<32x256xf32> to vector<32xf32>
    %3 = vector.shape_cast %2 : vector<32xf32> to vector<32x1xf32>
    %cst_2 = arith.constant 3.906250e-03 : f32
    %4 = vector.broadcast %cst_2 : f32 to vector<32x1xf32>
    %5 = arith.mulf %3, %4 : vector<32x1xf32>
    %c0_3 = arith.constant 0 : index
    %c0_4 = arith.constant 0 : index
    %6 = vector.load %arg2[%c0_3, %c0_4] : memref<4x32xf32, #tpu.memory_space<vmem>>, vector<4x32xf32>
    %c0_5 = arith.constant 0 : index
    %c0_6 = arith.constant 0 : index
    %7 = vector.load %arg3[%c0_5, %c0_6] : memref<4x1xf32, #tpu.memory_space<vmem>>, vector<4x1xf32>
    %c0_7 = arith.constant 0 : index
    %c0_8 = arith.constant 0 : index
    %8 = vector.load %arg4[%c0_7, %c0_8] : memref<32x4xf32, #tpu.memory_space<vmem>>, vector<32x4xf32>
    %c0_9 = arith.constant 0 : index
    %c0_10 = arith.constant 0 : index
    %9 = vector.load %arg5[%c0_9, %c0_10] : memref<32x1xf32, #tpu.memory_space<vmem>>, vector<32x1xf32>
    %10 = vector.shape_cast %5 : vector<32x1xf32> to vector<32x1xf32>
    %11 = vector.broadcast %10 : vector<32x1xf32> to vector<32x128xf32>
    %cst_11 = arith.constant dense<0.000000e+00> : vector<4x128xf32>
    %12 = tpu.matmul %6, %11, %cst_11 {dimension_numbers = #tpu.dot_dimension_numbers<[1], [0], [0], [1], [0, 0, 1, 1], [], []>} : vector<4x32xf32>, vector<32x128xf32>, vector<4x128xf32> -> vector<4x128xf32>
    %13 = vector.broadcast %7 : vector<4x1xf32> to vector<4x128xf32>
    %14 = arith.addf %12, %13 : vector<4x128xf32>
    %cst_12 = arith.constant 0.000000e+00 : f32
    %15 = vector.broadcast %cst_12 : f32 to vector<4x128xf32>
    %16 = arith.maximumf %14, %15 : vector<4x128xf32>
    %cst_13 = arith.constant dense<0.000000e+00> : vector<32x128xf32>
    %17 = tpu.matmul %8, %16, %cst_13 {dimension_numbers = #tpu.dot_dimension_numbers<[1], [0], [0], [1], [0, 0, 1, 1], [], []>} : vector<32x4xf32>, vector<4x128xf32>, vector<32x128xf32> -> vector<32x128xf32>
    %18 = vector.broadcast %9 : vector<32x1xf32> to vector<32x128xf32>
    %19 = arith.addf %17, %18 : vector<32x128xf32>
    %cst_14 = arith.constant 0.000000e+00 : f32
    %20 = vector.broadcast %cst_14 : f32 to vector<32x128xf32>
    %21 = arith.subf %20, %19 : vector<32x128xf32>
    %22 = math.exp %21 : vector<32x128xf32>
    %cst_15 = arith.constant 1.000000e+00 : f32
    %23 = vector.broadcast %cst_15 : f32 to vector<32x128xf32>
    %24 = arith.addf %23, %22 : vector<32x128xf32>
    %25 = tpu.reciprocal %24 : vector<32x128xf32> -> vector<32x128xf32>
    %26 = vector.extract_strided_slice %25 {offsets = [0, 0], sizes = [32, 1], strides = [1, 1]} : vector<32x128xf32> to vector<32x1xf32>
    %c0_16 = arith.constant 0 : index
    %c0_17 = arith.constant 0 : index
    %27 = vector.load %arg6[%c0_16, %c0_17] : memref<1x32xf32, #tpu.memory_space<vmem>>, vector<1x32xf32>
    %cst_18 = arith.constant dense<0.000000e+00> : vector<1x256xf32>
    %28 = tpu.matmul %27, %1, %cst_18 {dimension_numbers = #tpu.dot_dimension_numbers<[1], [0], [0], [1], [0, 0, 1, 1], [], []>} : vector<1x32xf32>, vector<32x256xf32>, vector<1x256xf32> -> vector<1x256xf32>
    %c0_19 = arith.constant 0 : index
    %c0_20 = arith.constant 0 : index
    %29 = vector.load %arg7[%c0_19, %c0_20] : memref<1x1xf32, #tpu.memory_space<vmem>>, vector<1x1xf32>
    %30 = vector.broadcast %29 : vector<1x1xf32> to vector<1x256xf32>
    %31 = arith.addf %28, %30 : vector<1x256xf32>
    %cst_21 = arith.constant 0.000000e+00 : f32
    %32 = vector.broadcast %cst_21 : f32 to vector<1x256xf32>
    %33 = arith.subf %32, %31 : vector<1x256xf32>
    %34 = math.exp %33 : vector<1x256xf32>
    %cst_22 = arith.constant 1.000000e+00 : f32
    %35 = vector.broadcast %cst_22 : f32 to vector<1x256xf32>
    %36 = arith.addf %35, %34 : vector<1x256xf32>
    %37 = tpu.reciprocal %36 : vector<1x256xf32> -> vector<1x256xf32>
    %38 = vector.broadcast %26 : vector<32x1xf32> to vector<32x256xf32>
    %39 = vector.broadcast %37 : vector<1x256xf32> to vector<32x256xf32>
    %40 = arith.addf %38, %39 : vector<32x256xf32>
    %41 = arith.mulf %1, %40 : vector<32x256xf32>
    %c0_23 = arith.constant 0 : index
    %c0_24 = arith.constant 0 : index
    %c0_25 = arith.constant 0 : index
    %42 = vector.load %arg8[%c0_23, %c0_24, %c0_25] : memref<1x32x256xf32, #tpu.memory_space<vmem>>, vector<1x32x256xf32>
    %43 = vector.shape_cast %42 : vector<1x32x256xf32> to vector<32x256xf32>
    %44 = vector.shape_cast %41 : vector<32x256xf32> to vector<1x32x256xf32>
    tpu.vector_store %arg8[%c0_23, %c0_24, %c0_25], %44 {strides = array<i32>} : memref<1x32x256xf32, #tpu.memory_space<vmem>>, vector<1x32x256xf32>,
    return
  }
  func.func @transform_0(%arg0: i32) -> (i32, i32, i32) {
    %c0_i32 = arith.constant 0 : i32
    %c0_i32_0 = arith.constant 0 : i32
    %c0_i32_1 = arith.constant 0 : i32
    return %arg0, %c0_i32, %c0_i32_0 : i32, i32, i32
  }
  func.func @transform_1(%arg0: i32) -> (i32, i32) {
    %c0_i32 = arith.constant 0 : i32
    %c0_i32_0 = arith.constant 0 : i32
    %c0_i32_1 = arith.constant 0 : i32
    return %c0_i32, %c0_i32_0 : i32, i32
  }
  func.func @transform_2(%arg0: i32) -> (i32, i32) {
    %c0_i32 = arith.constant 0 : i32
    %c0_i32_0 = arith.constant 0 : i32
    %c0_i32_1 = arith.constant 0 : i32
    return %c0_i32, %c0_i32_0 : i32, i32
  }
  func.func @transform_3(%arg0: i32) -> (i32, i32) {
    %c0_i32 = arith.constant 0 : i32
    %c0_i32_0 = arith.constant 0 : i32
    %c0_i32_1 = arith.constant 0 : i32
    return %c0_i32, %c0_i32_0 : i32, i32
  }
  func.func @transform_4(%arg0: i32) -> (i32, i32) {
    %c0_i32 = arith.constant 0 : i32
    %c0_i32_0 = arith.constant 0 : i32
    %c0_i32_1 = arith.constant 0 : i32
    return %c0_i32, %c0_i32_0 : i32, i32
  }
  func.func @transform_5(%arg0: i32) -> (i32, i32) {
    %c0_i32 = arith.constant 0 : i32
    %c0_i32_0 = arith.constant 0 : i32
    %c0_i32_1 = arith.constant 0 : i32
    return %c0_i32, %c0_i32_0 : i32, i32
  }
  func.func @transform_6(%arg0: i32) -> (i32, i32) {
    %c0_i32 = arith.constant 0 : i32
    %c0_i32_0 = arith.constant 0 : i32
    %c0_i32_1 = arith.constant 0 : i32
    return %c0_i32, %c0_i32_0 : i32, i32
  }
  func.func @transform_7(%arg0: i32) -> (i32, i32, i32) {
    %c0_i32 = arith.constant 0 : i32
    %c0_i32_0 = arith.constant 0 : i32
    %c0_i32_1 = arith.constant 0 : i32
    return %arg0, %c0_i32, %c0_i32_0 : i32, i32, i32
  }
}

</mosaic_0001>

<llo_original>
// kernel: tpu_custom_call.1
$region0: #{tpu_custom_call.1}
  #allocation0 [shape = 'u32[]', space=smem, size = 0x4, offset = 0x4, fixed_abs, tag = 'smem constant byte address 0x4 - core index']
  #allocation1 [shape = 'u32[144,128]{1,0:T(1,128)}', space=vmem, size = 0x12000, scoped, tag = 'internal scratch']
  #allocation2 [shape = 'f32[1,1]{1,0:T(1,128)S(1)}', space=vmem, size = 0x200, scoped, tag = 'scoped memory for tpu_custom_call.1']
  %s0 = inlined_call_operand.hbm [shape: f32[2,32,256], index: 0, kind: input, shape index: {}]
  %s1 = inlined_call_operand.vmem [shape: f32[4,32], index: 1, kind: input, shape index: {}]
  %s2 = inlined_call_operand.vmem [shape: f32[4,1], index: 2, kind: input, shape index: {}]
  %s3 = inlined_call_operand.vmem [shape: f32[32,4], index: 3, kind: input, shape index: {}]
  %s4 = inlined_call_operand.vmem [shape: f32[32,1], index: 4, kind: input, shape index: {}]
  %s5 = inlined_call_operand.vmem [shape: f32[1,32], index: 5, kind: input, shape index: {}]
  %s6 = inlined_call_operand.<no memory space> [shape: f32[1,1], index: 6, kind: input, shape index: {}]
  %s7 = inlined_call_operand.hbm [shape: f32[2,32,256], index: 7, kind: output, shape index: {}]
  %s8 = sld [smem:[#allocation0]]
  $region65: #{tpu_custom_call.1} parent=0
    _
  %s10 = ssub.s32 1, %s8
  %s11 = scalar_select 0, %s10, %s8
  %v12 = vstv %s6
  %13 = vst [vmem:[#allocation2] sm:$0x1] %v12
  $region1: #{tpu_custom_call.1} parent=0
    #allocation3 [shape = 'u8[65536]{0}', space=vmem, size = 0x10000, scoped, tag = 'input window, operand 0']
    #allocation4 [shape = 's32[2]{0}', space=sflag, size = 0x8, scoped, tag = 'scoped memory for tpu_custom_call.1']
    #allocation5 [shape = 's32[2]{0}', space=sflag, size = 0x8, scoped, tag = 'scoped memory for tpu_custom_call.1']
    #allocation6 [shape = 'u8[65536]{0}', space=vmem, size = 0x10000, scoped, tag = 'output window, operand 0']
    %14 = vsyncpa [#allocation4], 0
    %s15 = scalar_lea.sflag [#allocation4], 1
    %16 = vsyncpa %s15, 0
    %17 = vsyncpa [#allocation5], 0
    %s18 = scalar_lea.sflag [#allocation5], 1
    %19 = vsyncpa %s18, 0
    loop: start=0, step=1, limit=4
    $region2: #{tpu_custom_call.1} parent=1 // loop_pre_header
      _
    $region3: #{tpu_custom_call.1} parent=1 // loop_header
      %s21 = sphi 0, %s25
      %p22 = scmp.ge.s32.totalorder %s21, 4
      %s31 = sphi 0, %s33
      %s34 = sphi 0, %s31
      %s35 = sphi 0, %s34
      %s51 = sphi 0, %s35
      %s55 = sphi 0, %s55
      %s57 = sphi 0, %s55
      %s58 = sphi 0, %s57
      %s72 = sphi 0, %s58
      %s76 = sphi 0, %s76
      %s78 = sphi 0, %s76
      %s79 = sphi 0, %s78
      %s93 = sphi 0, %s79
      %s97 = sphi 0, %s97
      %s99 = sphi 0, %s97
      %s100 = sphi 0, %s99
      %s114 = sphi 0, %s100
      %s118 = sphi 0, %s118
      %s120 = sphi 0, %s118
      %s121 = sphi 0, %s120
      %s135 = sphi 0, %s121
      %s139 = sphi 0, %s139
      %s141 = sphi 0, %s139
      %s142 = sphi 0, %s141
      %s156 = sphi 0, %s142
      %s160 = sphi 0, %s160
      %s162 = sphi 0, %s160
      %s163 = sphi 0, %s162
      %s177 = sphi 0, %s163
      %s183 = sphi 0, %s185
      %s186 = sphi 0, %s183
      %s187 = sphi 0, %s186
      %s203 = sphi 0, %s187
    $region4: #{tpu_custom_call.1} parent=1 // loop_header_branch
      %24 = sbr.rel (%p22) target = $region8
    $region5: #{tpu_custom_call.1} parent=1 // loop_body
      %s26 = ssub.s32 %s21, 1
      %s27 = ssub.s32 %s21, 2
      %s28 = sadd.s32 %s21, 1
      %s29 = ssub.s32 %s21, %s28
      %p30 = scmp.eq.s32.totalorder %s29, 0
      %s32 = sadd.s32 %s31, 1
      %s33 = scalar_select %p30, %s31, %s32
      %p36 = pneg %p30
      %p37 = scmp.eq.s32.totalorder %s21, 1
      %p38 = por %p36, %p37
      %p39 = scmp.ne.s32.totalorder %s31, %s34
      %p40 = scmp.eq.s32.totalorder %s21, 0
      %p41 = por %p39, %p40
      %p42 = scmp.ne.s32.totalorder %s31, %s34
      %p43 = scmp.eq.s32.totalorder %s26, 1
      %p44 = por %p42, %p43
      %p45 = scmp.ne.s32.totalorder %s34, %s35
      %p46 = scmp.eq.s32.totalorder %s26, 0
      %p47 = por %p45, %p46
      %p48 = scmp.ne.s32.totalorder %s34, %s35
      %p49 = scmp.eq.s32.totalorder %s27, 1
      %p50 = por %p48, %p49
      %p52 = scmp.ne.s32.totalorder %s35, %s51
      %p53 = scmp.eq.s32.totalorder %s27, 0
      %p54 = por %p52, %p53
      %s56 = sadd.s32 %s55, 1
      %p59 = scmp.eq.s32.totalorder %s21, 1
      %p60 = scmp.ne.s32.totalorder %s55, %s57
      %p61 = scmp.eq.s32.totalorder %s21, 0
      %p62 = por %p60, %p61
      %p63 = scmp.ne.s32.totalorder %s55, %s57
      %p64 = scmp.eq.s32.totalorder %s26, 1
      %p65 = por %p63, %p64
      %p66 = scmp.ne.s32.totalorder %s57, %s58
      %p67 = scmp.eq.s32.totalorder %s26, 0
      %p68 = por %p66, %p67
      %p69 = scmp.ne.s32.totalorder %s57, %s58
      %p70 = scmp.eq.s32.totalorder %s27, 1
      %p71 = por %p69, %p70
      %p73 = scmp.ne.s32.totalorder %s58, %s72
      %p74 = scmp.eq.s32.totalorder %s27, 0
      %p75 = por %p73, %p74
      %s77 = sadd.s32 %s76, 1
      %p80 = scmp.eq.s32.totalorder %s21, 1
      %p81 = scmp.ne.s32.totalorder %s76, %s78
      %p82 = scmp.eq.s32.totalorder %s21, 0
      %p83 = por %p81, %p82
      %p84 = scmp.ne.s32.totalorder %s76, %s78
      %p85 = scmp.eq.s32.totalorder %s26, 1
      %p86 = por %p84, %p85
      %p87 = scmp.ne.s32.totalorder %s78, %s79
      %p88 = scmp.eq.s32.totalorder %s26, 0
      %p89 = por %p87, %p88
      %p90 = scmp.ne.s32.totalorder %s78, %s79
      %p91 = scmp.eq.s32.totalorder %s27, 1
      %p92 = por %p90, %p91
      %p94 = scmp.ne.s32.totalorder %s79, %s93
      %p95 = scmp.eq.s32.totalorder %s27, 0
      %p96 = por %p94, %p95
      %s98 = sadd.s32 %s97, 1
      %p101 = scmp.eq.s32.totalorder %s21, 1
      %p102 = scmp.ne.s32.totalorder %s97, %s99
      %p103 = scmp.eq.s32.totalorder %s21, 0
      %p104 = por %p102, %p103
      %p105 = scmp.ne.s32.totalorder %s97, %s99
      %p106 = scmp.eq.s32.totalorder %s26, 1
      %p107 = por %p105, %p106
      %p108 = scmp.ne.s32.totalorder %s99, %s100
      %p109 = scmp.eq.s32.totalorder %s26, 0
      %p110 = por %p108, %p109
      %p111 = scmp.ne.s32.totalorder %s99, %s100
      %p112 = scmp.eq.s32.totalorder %s27, 1
      %p113 = por %p111, %p112
      %p115 = scmp.ne.s32.totalorder %s100, %s114
      %p116 = scmp.eq.s32.totalorder %s27, 0
      %p117 = por %p115, %p116
      %s119 = sadd.s32 %s118, 1
      %p122 = scmp.eq.s32.totalorder %s21, 1
      %p123 = scmp.ne.s32.totalorder %s118, %s120
      %p124 = scmp.eq.s32.totalorder %s21, 0
      %p125 = por %p123, %p124
      %p126 = scmp.ne.s32.totalorder %s118, %s120
      %p127 = scmp.eq.s32.totalorder %s26, 1
      %p128 = por %p126, %p127
      %p129 = scmp.ne.s32.totalorder %s120, %s121
      %p130 = scmp.eq.s32.totalorder %s26, 0
      %p131 = por %p129, %p130
      %p132 = scmp.ne.s32.totalorder %s120, %s121
      %p133 = scmp.eq.s32.totalorder %s27, 1
      %p134 = por %p132, %p133
      %p136 = scmp.ne.s32.totalorder %s121, %s135
      %p137 = scmp.eq.s32.totalorder %s27, 0
      %p138 = por %p136, %p137
      %s140 = sadd.s32 %s139, 1
      %p143 = scmp.eq.s32.totalorder %s21, 1
      %p144 = scmp.ne.s32.totalorder %s139, %s141
      %p145 = scmp.eq.s32.totalorder %s21, 0
      %p146 = por %p144, %p145
      %p147 = scmp.ne.s32.totalorder %s139, %s141
      %p148 = scmp.eq.s32.totalorder %s26, 1
      %p149 = por %p147, %p148
      %p150 = scmp.ne.s32.totalorder %s141, %s142
      %p151 = scmp.eq.s32.totalorder %s26, 0
      %p152 = por %p150, %p151
      %p153 = scmp.ne.s32.totalorder %s141, %s142
      %p154 = scmp.eq.s32.totalorder %s27, 1
      %p155 = por %p153, %p154
      %p157 = scmp.ne.s32.totalorder %s142, %s156
      %p158 = scmp.eq.s32.totalorder %s27, 0
      %p159 = por %p157, %p158
      %s161 = sadd.s32 %s160, 1
      %p164 = scmp.eq.s32.totalorder %s21, 1
      %p165 = scmp.ne.s32.totalorder %s160, %s162
      %p166 = scmp.eq.s32.totalorder %s21, 0
      %p167 = por %p165, %p166
      %p168 = scmp.ne.s32.totalorder %s160, %s162
      %p169 = scmp.eq.s32.totalorder %s26, 1
      %p170 = por %p168, %p169
      %p171 = scmp.ne.s32.totalorder %s162, %s163
      %p172 = scmp.eq.s32.totalorder %s26, 0
      %p173 = por %p171, %p172
      %p174 = scmp.ne.s32.totalorder %s162, %s163
      %p175 = scmp.eq.s32.totalorder %s27, 1
      %p176 = por %p174, %p175
      %p178 = scmp.ne.s32.totalorder %s163, %s177
      %p179 = scmp.eq.s32.totalorder %s27, 0
      %p180 = por %p178, %p179
      %s181 = ssub.s32 %s21, %s28
      %p182 = scmp.eq.s32.totalorder %s181, 0
      %s184 = sadd.s32 %s183, 1
      %s185 = scalar_select %p182, %s183, %s184
      %p188 = pneg %p182
      %p189 = scmp.eq.s32.totalorder %s21, 1
      %p190 = por %p188, %p189
      %p191 = scmp.ne.s32.totalorder %s183, %s186
      %p192 = scmp.eq.s32.totalorder %s21, 0
      %p193 = por %p191, %p192
      %p194 = scmp.ne.s32.totalorder %s183, %s186
      %p195 = scmp.eq.s32.totalorder %s26, 1
      %p196 = por %p194, %p195
      %p197 = scmp.ne.s32.totalorder %s186, %s187
      %p198 = scmp.eq.s32.totalorder %s26, 0
      %p199 = por %p197, %p198
      %p200 = scmp.ne.s32.totalorder %s186, %s187
      %p201 = scmp.eq.s32.totalorder %s27, 1
      %p202 = por %p200, %p201
      %p204 = scmp.ne.s32.totalorder %s187, %s203
      %p205 = scmp.eq.s32.totalorder %s27, 0
      %p206 = por %p204, %p205
      %p207 = scmp.le.s32.totalorder 1, %s21
      %p208 = scmp.lt.s32.totalorder %s21, 3
      %p209 = pnand %p207, %p208
      %p210 = pneg %p209
      // Predicated region
      $region9: #{tpu_custom_call.1} parent=5 // pred_check
        _
      $region10: #{tpu_custom_call.1} parent=5 // pred_check_branch
        %212 = sbr.rel (%p209) target = $region12
      $region11: #{tpu_custom_call.1} parent=5 // pred_region
        %s213 = ssub.s32 %s21, 1
        // Predicated region
        $region13: #{tpu_custom_call.1} parent=11 // pred_check
          %p214 = pneg %p68
        $region14: #{tpu_custom_call.1} parent=11 // pred_check_branch
          %216 = sbr.rel (%p214) target = $region16
        $region15: #{tpu_custom_call.1} parent=11 // pred_region
          _
        $region16: #{tpu_custom_call.1} parent=11 // pred_fallthru
          _
        // Predicated region
        $region17: #{tpu_custom_call.1} parent=11 // pred_check
          %p217 = pneg %p89
        $region18: #{tpu_custom_call.1} parent=11 // pred_check_branch
          %219 = sbr.rel (%p217) target = $region20
        $region19: #{tpu_custom_call.1} parent=11 // pred_region
          _
        $region20: #{tpu_custom_call.1} parent=11 // pred_fallthru
          _
        // Predicated region
        $region21: #{tpu_custom_call.1} parent=11 // pred_check
          %p220 = pneg %p110
        $region22: #{tpu_custom_call.1} parent=11 // pred_check_branch
          %222 = sbr.rel (%p220) target = $region24
        $region23: #{tpu_custom_call.1} parent=11 // pred_region
          _
        $region24: #{tpu_custom_call.1} parent=11 // pred_fallthru
          _
        // Predicated region
        $region25: #{tpu_custom_call.1} parent=11 // pred_check
          %p223 = pneg %p131
        $region26: #{tpu_custom_call.1} parent=11 // pred_check_branch
          %225 = sbr.rel (%p223) target = $region28
        $region27: #{tpu_custom_call.1} parent=11 // pred_region
          _
        $region28: #{tpu_custom_call.1} parent=11 // pred_fallthru
          _
        // Predicated region
        $region29: #{tpu_custom_call.1} parent=11 // pred_check
          %p226 = pneg %p152
        $region30: #{tpu_custom_call.1} parent=11 // pred_check_branch
          %228 = sbr.rel (%p226) target = $region32
        $region31: #{tpu_custom_call.1} parent=11 // pred_region
          _
        $region32: #{tpu_custom_call.1} parent=11 // pred_fallthru
          _
        // Predicated region
        $region33: #{tpu_custom_call.1} parent=11 // pred_check
          %p229 = pneg %p173
        $region34: #{tpu_custom_call.1} parent=11 // pred_check_branch
          %231 = sbr.rel (%p229) target = $region36
        $region35: #{tpu_custom_call.1} parent=11 // pred_region
          _
        $region36: #{tpu_custom_call.1} parent=11 // pred_fallthru
          _
      $region12: #{tpu_custom_call.1} parent=5 // pred_fallthru
        _
      %p232 = scmp.lt.s32.totalorder %s21, 2
      // Predicated region
      $region37: #{tpu_custom_call.1} parent=5 // pred_check
        %p233 = pneg %p232
      $region38: #{tpu_custom_call.1} parent=5 // pred_check_branch
        %235 = sbr.rel (%p233) target = $region40
      $region39: #{tpu_custom_call.1} parent=5 // pred_region
        // Predicated region
        $region41: #{tpu_custom_call.1} parent=39 // pred_check
          %p236 = pneg %p41
        $region42: #{tpu_custom_call.1} parent=39 // pred_check_branch
          %238 = sbr.rel (%p236) target = $region44
        $region43: #{tpu_custom_call.1} parent=39 // pred_region
          %s239 = sand.u32 %s31, 1
          %s240 = scalar_lea.sflag [#allocation4], %s239
          %s241 = sand.u32 %s31, 1
          %s242 = smul.addr %s241, 64
          %s243 = scalar_lea.vmem [#allocation3], %s242
          %s245 = ssub.s32 1024, 1024
          %246 = vsyncadd %s240, %s245
          %s247 = smul.addr %s21, 8
          %s248 = smul.addr %s247, 128
          %s249 = scalar_lea.hbm %s0, %s248
          %s250 = sshll.u32 %s243, 4
          %s251 = int_to_ptr.vmem [resolvable:$true] %s250
          %256 = dma.hbm_to_vmem [thread:$0]  %s249, 1024, %s251, %s240, 256, 256, 16
        $region44: #{tpu_custom_call.1} parent=39 // pred_fallthru
          _
      $region40: #{tpu_custom_call.1} parent=5 // pred_fallthru
        _
      %p257 = scmp.le.s32.totalorder 1, %s21
      %p258 = scmp.lt.s32.totalorder %s21, 3
      %p259 = pnand %p257, %p258
      %p260 = pneg %p259
      // Predicated region
      $region45: #{tpu_custom_call.1} parent=5 // pred_check
        _
      $region46: #{tpu_custom_call.1} parent=5 // pred_check_branch
        %262 = sbr.rel (%p259) target = $region48
      $region47: #{tpu_custom_call.1} parent=5 // pred_region
        %s263 = ssub.s32 %s21, 1
        %s264 = sand.u32 %s34, 1
        %s265 = scalar_lea.sflag [#allocation4], %s264
        %s266 = sand.u32 %s34, 1
        %s267 = smul.addr %s266, 64
        %s268 = scalar_lea.vmem [#allocation3], %s267
        // Predicated region
        $region49: #{tpu_custom_call.1} parent=47 // pred_check
          %p269 = pneg %p47
        $region50: #{tpu_custom_call.1} parent=47 // pred_check_branch
          %271 = sbr.rel (%p269) target = $region52
        $region51: #{tpu_custom_call.1} parent=47 // pred_region
          %272 = dma.done %s265, 1024
        $region52: #{tpu_custom_call.1} parent=47 // pred_fallthru
          _
        %s273 = sand.u32 %s34, 1
        %s274 = scalar_lea.sflag [#allocation4], %s273
        %s275 = sand.u32 %s34, 1
        %s276 = smul.addr %s275, 64
        %s277 = scalar_lea.vmem [#allocation3], %s276
        %p278 = pneg %p47
        %p279 = pneg %p44
        %p280 = pneg %p68
        %p281 = pneg %p65
        %p282 = pneg %p89
        %p283 = pneg %p86
        %p284 = pneg %p110
        %p285 = pneg %p107
        %p286 = pneg %p131
        %p287 = pneg %p128
        %p288 = pneg %p152
        %p289 = pneg %p149
        %p290 = pneg %p173
        %p291 = pneg %p170
        %p292 = pneg %p199
        %p293 = pneg %p196
        %s294 = sand.u32 %s186, 1
        %s295 = scalar_lea.sflag [#allocation5], %s294
        %s296 = sand.u32 %s186, 1
        %s297 = smul.addr %s296, 64
        %s298 = scalar_lea.vmem [#allocation6], %s297
        %v299 = vld [vmem:[%s268] sm:$0xff]
        %v300 = vld [vmem:[%s268 + $0x8] sm:$0xff]
        %v301 = vld [vmem:[%s268 + $0x10] sm:$0xff]
        %v302 = vld [vmem:[%s268 + $0x18] sm:$0xff]
        %v303 = vld [vmem:[%s268 + $0x20] sm:$0xff]
        %v304 = vld [vmem:[%s268 + $0x28] sm:$0xff]
        %v305 = vld [vmem:[%s268 + $0x30] sm:$0xff]
        %v306 = vld [vmem:[%s268 + $0x38] sm:$0xff]
        %v307 = vadd.f32 %v299, %v300
        %308 = vadd.xlane.f32.xlu0 %v307
        %v309 = vpop.xlane.xlu0 %308
        %v310 = vadd.f32 %v301, %v302
        %311 = vadd.xlane.f32.xlu0 %v310
        %v312 = vpop.xlane.xlu0 %311
        %v313 = vadd.f32 %v303, %v304
        %314 = vadd.xlane.f32.xlu0 %v313
        %v315 = vpop.xlane.xlu0 %314
        %v316 = vadd.f32 %v305, %v306
        %317 = vadd.xlane.f32.xlu0 %v316
        %v318 = vpop.xlane.xlu0 %317
        %v319 = vmul.f32 %v309, 0.00390625
        %v320 = vmul.f32 %v312, 0.00390625
        %v321 = vmul.f32 %v315, 0.00390625
        %v322 = vmul.f32 %v318, 0.00390625
        %v323 = vld [vmem:[%s1] sm:$0xf]
        %v324 = vld [vmem:[%s2] sm:$0xf]
        %v325 = vld [vmem:[%s3] sm:$0xff]
        %v326 = vld [vmem:[%s3 + $0x8] sm:$0xff]
        %v327 = vld [vmem:[%s3 + $0x10] sm:$0xff]
        %v328 = vld [vmem:[%s3 + $0x18] sm:$0xff]
        %v329 = vld [vmem:[%s4] sm:$0xff]
        %v330 = vld [vmem:[%s4 + $0x8] sm:$0xff]
        %v331 = vld [vmem:[%s4 + $0x10] sm:$0xff]
        %v332 = vld [vmem:[%s4 + $0x18] sm:$0xff]
        %334 = vset.pattern.permute.xlu0 0
        %335 = vperm.xlu0 %334, %v324
        %v336 = vpop.permute.xlu0 %335
        %vm338 = vcmask 261120
        %v340 = vsel %vm338, %v323, 0
        %342 = vmatprep.subr.mxu0 0.0
        %343 = vmatpush1.msra.mxu0 %v319
        %344 = vmatprep.subr.mxu0 0.0
        %345 = vmatpush1.msra.mxu0 %v320
        %346 = vmatprep.subr.mxu0 0.0
        %347 = vmatpush1.msra.mxu0 %v321
        %348 = vmatprep.subr.mxu0 0.0
        %349 = vmatpush1.msra.mxu0 %v322
        %350 = vmatprep.subr.mxu0 0.0
        %351 = vmatpush1.msra.mxu0 0.0
        %352 = vmatprep.subr.mxu0 0.0
        %353 = vmatpush1.msra.mxu0 0.0
        %354 = vmatprep.subr.mxu0 0.0
        %355 = vmatpush1.msra.mxu0 0.0
        %356 = vmatprep.subr.mxu0 0.0
        %357 = vmatpush1.msra.mxu0 0.0
        %358 = vmatprep.subr.mxu0 0.0
        %359 = vmatpush1.msra.mxu0 0.0
        %360 = vmatprep.subr.mxu0 0.0
        %361 = vmatpush1.msra.mxu0 0.0
        %362 = vmatprep.subr.mxu0 0.0
        %363 = vmatpush1.msra.mxu0 0.0
        %364 = vmatprep.subr.mxu0 0.0
        %365 = vmatpush1.msra.mxu0 0.0
        %366 = vmatprep.subr.mxu0 0.0
        %367 = vmatpush1.msra.mxu0 0.0
        %368 = vmatprep.subr.mxu0 0.0
        %369 = vmatpush1.msra.mxu0 0.0
        %370 = vmatprep.subr.mxu0 0.0
        %371 = vmatpush1.msra.mxu0 0.0
        %372 = vmatprep.subr.mxu0 0.0
        %373 = vmatpush1.msra.mxu0 0.0
        %374 = vmatprep.subr.mxu0 0.0
        %375 = vmatpush1.msra.mxu0 0.0
        %376 = vmatprep.subr.mxu0 0.0
        %377 = vmatpush1.msra.mxu0 0.0
        %378 = vmatprep.subr.mxu0 0.0
        %379 = vmatpush1.msra.mxu0 0.0
        %380 = vmatprep.subr.mxu0 0.0
        %381 = vmatpush1.msra.mxu0 0.0
        %382 = vmatprep.subr.mxu0 0.0
        %383 = vmatpush1.msra.mxu0 0.0
        %384 = vmatprep.subr.mxu0 0.0
        %385 = vmatpush1.msra.mxu0 0.0
        %386 = vmatprep.subr.mxu0 0.0
        %387 = vmatpush1.msra.mxu0 0.0
        %388 = vmatprep.subr.mxu0 0.0
        %389 = vmatpush1.msra.mxu0 0.0
        %390 = vmatprep.subr.mxu0 0.0
        %391 = vmatpush1.msra.mxu0 0.0
        %392 = vmatprep.subr.mxu0 0.0
        %393 = vmatpush1.msra.mxu0 0.0
        %394 = vmatprep.subr.mxu0 0.0
        %395 = vmatpush1.msra.mxu0 0.0
        %396 = vmatprep.subr.mxu0 0.0
        %397 = vmatpush1.msra.mxu0 0.0
        %398 = vmatprep.subr.mxu0 0.0
        %399 = vmatpush1.msra.mxu0 0.0
        %400 = vmatprep.subr.mxu0 0.0
        %401 = vmatpush1.msra.mxu0 0.0
        %402 = vmatprep.subr.mxu0 0.0
        %403 = vmatpush1.msra.mxu0 0.0
        %404 = vmatprep.subr.mxu0 0.0
        %405 = vmatpush1.msra.mxu0 0.0
        %406 = vmatprep.mubr.f32.mxu0 0.0
        %407 = vmatmul.mubr.f32.gmra.mrb[0].mxu0 %v340
        %v408 = vpop.f32.mrb[0].mxu0
        %v409 = vadd.f32 %v336, %v408
        %v410 = vpop.f32.mrb[0].mxu0
        %411 = vdwg.mxu0
        %v412 = vmax.f32 %v409, 0.0
        %414 = vset.pattern.permute.xlu0 0
        %415 = vperm.xlu0 %414, %v329
        %v416 = vpop.permute.xlu0 %415
        %419 = vset.pattern.permute.xlu0 0
        %420 = vperm.xlu0 %419, %v330
        %v421 = vpop.permute.xlu0 %420
        %424 = vset.pattern.permute.xlu0 0
        %425 = vperm.xlu0 %424, %v331
        %v426 = vpop.permute.xlu0 %425
        %429 = vset.pattern.permute.xlu0 0
        %430 = vperm.xlu0 %429, %v332
        %v431 = vpop.permute.xlu0 %430
        %vm433 = vcmask 31744
        %v435 = vsel %vm433, %v325, 0
        %v438 = vsel %vm433, %v326, 0
        %v441 = vsel %vm433, %v327, 0
        %v444 = vsel %vm433, %v328, 0
        %vm446 = vcmask 1043456
        %v448 = vsel %vm446, %v412, 0
        %450 = vmatprep.subr.mxu0 0.0
        %451 = vmatpush1.msra.mxu0 %v448
        %452 = vmatprep.subr.mxu0 0.0
        %453 = vmatpush1.msra.mxu0 0.0
        %454 = vmatprep.subr.mxu0 0.0
        %455 = vmatpush1.msra.mxu0 0.0
        %456 = vmatprep.subr.mxu0 0.0
        %457 = vmatpush1.msra.mxu0 0.0
        %458 = vmatprep.subr.mxu0 0.0
        %459 = vmatpush1.msra.mxu0 0.0
        %460 = vmatprep.subr.mxu0 0.0
        %461 = vmatpush1.msra.mxu0 0.0
        %462 = vmatprep.subr.mxu0 0.0
        %463 = vmatpush1.msra.mxu0 0.0
        %464 = vmatprep.subr.mxu0 0.0
        %465 = vmatpush1.msra.mxu0 0.0
        %466 = vmatprep.subr.mxu0 0.0
        %467 = vmatpush1.msra.mxu0 0.0
        %468 = vmatprep.subr.mxu0 0.0
        %469 = vmatpush1.msra.mxu0 0.0
        %470 = vmatprep.subr.mxu0 0.0
        %471 = vmatpush1.msra.mxu0 0.0
        %472 = vmatprep.subr.mxu0 0.0
        %473 = vmatpush1.msra.mxu0 0.0
        %474 = vmatprep.subr.mxu0 0.0
        %475 = vmatpush1.msra.mxu0 0.0
        %476 = vmatprep.subr.mxu0 0.0
        %477 = vmatpush1.msra.mxu0 0.0
        %478 = vmatprep.subr.mxu0 0.0
        %479 = vmatpush1.msra.mxu0 0.0
        %480 = vmatprep.subr.mxu0 0.0
        %481 = vmatpush1.msra.mxu0 0.0
        %482 = vmatprep.subr.mxu0 0.0
        %483 = vmatpush1.msra.mxu0 0.0
        %484 = vmatprep.subr.mxu0 0.0
        %485 = vmatpush1.msra.mxu0 0.0
        %486 = vmatprep.subr.mxu0 0.0
        %487 = vmatpush1.msra.mxu0 0.0
        %488 = vmatprep.subr.mxu0 0.0
        %489 = vmatpush1.msra.mxu0 0.0
        %490 = vmatprep.subr.mxu0 0.0
        %491 = vmatpush1.msra.mxu0 0.0
        %492 = vmatprep.subr.mxu0 0.0
        %493 = vmatpush1.msra.mxu0 0.0
        %494 = vmatprep.subr.mxu0 0.0
        %495 = vmatpush1.msra.mxu0 0.0
        %496 = vmatprep.subr.mxu0 0.0
        %497 = vmatpush1.msra.mxu0 0.0
        %498 = vmatprep.subr.mxu0 0.0
        %499 = vmatpush1.msra.mxu0 0.0
        %500 = vmatprep.subr.mxu0 0.0
        %501 = vmatpush1.msra.mxu0 0.0
        %502 = vmatprep.subr.mxu0 0.0
        %503 = vmatpush1.msra.mxu0 0.0
        %504 = vmatprep.subr.mxu0 0.0
        %505 = vmatpush1.msra.mxu0 0.0
        %506 = vmatprep.subr.mxu0 0.0
        %507 = vmatpush1.msra.mxu0 0.0
        %508 = vmatprep.subr.mxu0 0.0
        %509 = vmatpush1.msra.mxu0 0.0
        %510 = vmatprep.subr.mxu0 0.0
        %511 = vmatpush1.msra.mxu0 0.0
        %512 = vmatprep.subr.mxu0 0.0
        %513 = vmatpush1.msra.mxu0 0.0
        %514 = vmatprep.mubr.f32.mxu0 0.0
        %515 = vmatmul.mubr.f32.gmra.mrb[0].mxu0 %v435
        %v516 = vpop.f32.mrb[0].mxu0
        %v517 = vadd.f32 %v416, %v516
        %v518 = vpop.f32.mrb[0].mxu0
        %519 = vmatprep.mubr.f32.mxu0 0.0
        %520 = vmatmul.mubr.f32.gmra.mrb[0].mxu0 %v438
        %v521 = vpop.f32.mrb[0].mxu0
        %v522 = vadd.f32 %v421, %v521
        %v523 = vpop.f32.mrb[0].mxu0
        %524 = vmatprep.mubr.f32.mxu0 0.0
        %525 = vmatmul.mubr.f32.gmra.mrb[0].mxu0 %v441
        %v526 = vpop.f32.mrb[0].mxu0
        %v527 = vadd.f32 %v426, %v526
        %v528 = vpop.f32.mrb[0].mxu0
        %529 = vmatprep.mubr.f32.mxu0 0.0
        %530 = vmatmul.mubr.f32.gmra.mrb[0].mxu0 %v444
        %v531 = vpop.f32.mrb[0].mxu0
        %v532 = vadd.f32 %v431, %v531
        %v533 = vpop.f32.mrb[0].mxu0
        %534 = vdwg.mxu0
        %v535 = vsub.f32 0.0, %v517
        %v536 = vsub.f32 0.0, %v522
        %v537 = vsub.f32 0.0, %v527
        %v538 = vsub.f32 0.0, %v532
        %v539 = vmul.f32 %v535, 1.442695
        %v540 = vpow.pop %v539
        %v541 = vmul.f32 %v536, 1.442695
        %v542 = vpow.pop %v541
        %v543 = vmul.f32 %v537, 1.442695
        %v544 = vpow.pop %v543
        %v545 = vmul.f32 %v538, 1.442695
        %v546 = vpow.pop %v545
        %v547 = vadd.f32 %v540, 1.0
        %v548 = vadd.f32 %v542, 1.0
        %v549 = vadd.f32 %v544, 1.0
        %v550 = vadd.f32 %v546, 1.0
        %v551 = vrcp.pop %v547
        %v552 = vrcp.pop %v548
        %v553 = vrcp.pop %v549
        %v554 = vrcp.pop %v550
        %v555 = vld [vmem:[%s5] sm:$0x1]
        %v556 = vld [vmem:[#allocation2] sm:$0x1]
        %558 = vset.pattern.permute.xlu0 0
        %559 = vperm.xlu0 %558, %v556
        %v560 = vpop.permute.xlu0 %559
        %v562 = vlaneseq
        %v563 = vshrl.u32 %v562, 7
        %v564 = vsub.s32 0, %v563
        %v565 = vrot.slane %v560, %v564
        %v567 = vsel %vm338, %v555, 0
        %569 = vmatprep.subr.mxu0 %v300
        %570 = vmatpush1.msra.mxu0 %v299
        %571 = vmatprep.subr.mxu0 %v302
        %572 = vmatpush1.msra.mxu0 %v301
        %573 = vmatprep.subr.mxu0 %v304
        %574 = vmatpush1.msra.mxu0 %v303
        %575 = vmatprep.subr.mxu0 %v306
        %576 = vmatpush1.msra.mxu0 %v305
        %577 = vmatprep.subr.mxu0 0.0
        %578 = vmatpush1.msra.mxu0 0.0
        %579 = vmatprep.subr.mxu0 0.0
        %580 = vmatpush1.msra.mxu0 0.0
        %581 = vmatprep.subr.mxu0 0.0
        %582 = vmatpush1.msra.mxu0 0.0
        %583 = vmatprep.subr.mxu0 0.0
        %584 = vmatpush1.msra.mxu0 0.0
        %585 = vmatprep.subr.mxu0 0.0
        %586 = vmatpush1.msra.mxu0 0.0
        %587 = vmatprep.subr.mxu0 0.0
        %588 = vmatpush1.msra.mxu0 0.0
        %589 = vmatprep.subr.mxu0 0.0
        %590 = vmatpush1.msra.mxu0 0.0
        %591 = vmatprep.subr.mxu0 0.0
        %592 = vmatpush1.msra.mxu0 0.0
        %593 = vmatprep.subr.mxu0 0.0
        %594 = vmatpush1.msra.mxu0 0.0
        %595 = vmatprep.subr.mxu0 0.0
        %596 = vmatpush1.msra.mxu0 0.0
        %597 = vmatprep.subr.mxu0 0.0
        %598 = vmatpush1.msra.mxu0 0.0
        %599 = vmatprep.subr.mxu0 0.0
        %600 = vmatpush1.msra.mxu0 0.0
        %601 = vmatprep.subr.mxu0 0.0
        %602 = vmatpush1.msra.mxu0 0.0
        %603 = vmatprep.subr.mxu0 0.0
        %604 = vmatpush1.msra.mxu0 0.0
        %605 = vmatprep.subr.mxu0 0.0
        %606 = vmatpush1.msra.mxu0 0.0
        %607 = vmatprep.subr.mxu0 0.0
        %608 = vmatpush1.msra.mxu0 0.0
        %609 = vmatprep.subr.mxu0 0.0
        %610 = vmatpush1.msra.mxu0 0.0
        %611 = vmatprep.subr.mxu0 0.0
        %612 = vmatpush1.msra.mxu0 0.0
        %613 = vmatprep.subr.mxu0 0.0
        %614 = vmatpush1.msra.mxu0 0.0
        %615 = vmatprep.subr.mxu0 0.0
        %616 = vmatpush1.msra.mxu0 0.0
        %617 = vmatprep.subr.mxu0 0.0
        %618 = vmatpush1.msra.mxu0 0.0
        %619 = vmatprep.subr.mxu0 0.0
        %620 = vmatpush1.msra.mxu0 0.0
        %621 = vmatprep.subr.mxu0 0.0
        %622 = vmatpush1.msra.mxu0 0.0
        %623 = vmatprep.subr.mxu0 0.0
        %624 = vmatpush1.msra.mxu0 0.0
        %625 = vmatprep.subr.mxu0 0.0
        %626 = vmatpush1.msra.mxu0 0.0
        %627 = vmatprep.subr.mxu0 0.0
        %628 = vmatpush1.msra.mxu0 0.0
        %629 = vmatprep.subr.mxu0 0.0
        %630 = vmatpush1.msra.mxu0 0.0
        %631 = vmatprep.subr.mxu0 0.0
        %632 = vmatpush1.msra.mxu0 0.0
        %633 = vmatprep.mubr.f32.mxu0 0.0
        %634 = vmatmul.mubr.f32.gmra.mrb[0].mxu0 %v567
        %v635 = vpop.f32.mrb[0].mxu0
        %v636 = vadd.f32 %v565, %v635
        %v637 = vpop.f32.mrb[0].mxu0
        %v638 = vadd.f32 %v565, %v637
        %639 = vdwg.mxu0
        %v640 = vsub.f32 0.0, %v636
        %v641 = vsub.f32 0.0, %v638
        %v642 = vmul.f32 %v640, 1.442695
        %v643 = vpow.pop %v642
        %v644 = vmul.f32 %v641, 1.442695
        %v645 = vpow.pop %v644
        %v646 = vadd.f32 %v643, 1.0
        %v647 = vadd.f32 %v645, 1.0
        %v648 = vrcp.pop %v646
        %v649 = vrcp.pop %v647
        %651 = vset.pattern.permute.xlu0 0
        %652 = vperm.xlu0 %651, %v551
        %v653 = vpop.permute.xlu0 %652
        %656 = vset.pattern.permute.xlu0 0
        %657 = vperm.xlu0 %656, %v552
        %v658 = vpop.permute.xlu0 %657
        %661 = vset.pattern.permute.xlu0 0
        %662 = vperm.xlu0 %661, %v553
        %v663 = vpop.permute.xlu0 %662
        %666 = vset.pattern.permute.xlu0 0
        %667 = vperm.xlu0 %666, %v554
        %v668 = vpop.permute.xlu0 %667
        %v670 = vlaneseq
        %v671 = vshrl.u32 %v670, 7
        %v672 = vsub.s32 0, %v671
        %v673 = vrot.slane %v648, %v672
        %v674 = vlaneseq
        %v675 = vshrl.u32 %v674, 7
        %v676 = vsub.s32 0, %v675
        %v677 = vrot.slane %v649, %v676
        %v678 = vadd.f32 %v653, %v673
        %v679 = vadd.f32 %v653, %v677
        %v680 = vadd.f32 %v658, %v673
        %v681 = vadd.f32 %v658, %v677
        %v682 = vadd.f32 %v663, %v673
        %v683 = vadd.f32 %v663, %v677
        %v684 = vadd.f32 %v668, %v673
        %v685 = vadd.f32 %v668, %v677
        %v686 = vmul.f32 %v299, %v678
        %v687 = vmul.f32 %v300, %v679
        %v688 = vmul.f32 %v301, %v680
        %v689 = vmul.f32 %v302, %v681
        %v690 = vmul.f32 %v303, %v682
        %v691 = vmul.f32 %v304, %v683
        %v692 = vmul.f32 %v305, %v684
        %v693 = vmul.f32 %v306, %v685
        %694 = vst [vmem:[%s298] sm:$0xff] %v686
        %695 = vst [vmem:[%s298 + $0x8] sm:$0xff] %v687
        %696 = vst [vmem:[%s298 + $0x10] sm:$0xff] %v688
        %697 = vst [vmem:[%s298 + $0x18] sm:$0xff] %v689
        %698 = vst [vmem:[%s298 + $0x20] sm:$0xff] %v690
        %699 = vst [vmem:[%s298 + $0x28] sm:$0xff] %v691
        %700 = vst [vmem:[%s298 + $0x30] sm:$0xff] %v692
        %701 = vst [vmem:[%s298 + $0x38] sm:$0xff] %v693
        %s702 = sand.u32 %s186, 1
        %s703 = scalar_lea.sflag [#allocation5], %s702
        %s704 = sand.u32 %s186, 1
        %s705 = smul.addr %s704, 64
        %s706 = scalar_lea.vmem [#allocation6], %s705
        // Predicated region
        $region53: #{tpu_custom_call.1} parent=47 // pred_check
          %p707 = pneg %p196
        $region54: #{tpu_custom_call.1} parent=47 // pred_check_branch
          %709 = sbr.rel (%p707) target = $region56
        $region55: #{tpu_custom_call.1} parent=47 // pred_region
          %s711 = ssub.s32 1024, 1024
          %712 = vsyncadd %s703, %s711
          %s713 = smul.addr %s26, 8
          %s714 = smul.addr %s713, 128
          %s715 = scalar_lea.hbm %s7, %s714
          %s716 = sshll.u32 %s706, 4
          %s717 = int_to_ptr.vmem [resolvable:$true] %s716
          %722 = dma.vmem_to_hbm [thread:$0]  %s717, 1024, %s715, %s703, 256, 256, 16
        $region56: #{tpu_custom_call.1} parent=47 // pred_fallthru
          _
      $region48: #{tpu_custom_call.1} parent=5 // pred_fallthru
        _
      %p723 = scmp.le.s32.totalorder 2, %s21
      // Predicated region
      $region57: #{tpu_custom_call.1} parent=5 // pred_check
        %p724 = pneg %p723
      $region58: #{tpu_custom_call.1} parent=5 // pred_check_branch
        %726 = sbr.rel (%p724) target = $region60
      $region59: #{tpu_custom_call.1} parent=5 // pred_region
        %s727 = ssub.s32 %s21, 2
        // Predicated region
        $region61: #{tpu_custom_call.1} parent=59 // pred_check
          %p728 = pneg %p202
        $region62: #{tpu_custom_call.1} parent=59 // pred_check_branch
          %730 = sbr.rel (%p728) target = $region64
        $region63: #{tpu_custom_call.1} parent=59 // pred_region
          %s731 = sand.u32 %s187, 1
          %s732 = scalar_lea.sflag [#allocation5], %s731
          %s733 = sand.u32 %s187, 1
          %s734 = smul.addr %s733, 64
          %s735 = scalar_lea.vmem [#allocation6], %s734
          %736 = dma.done %s732, 1024
        $region64: #{tpu_custom_call.1} parent=59 // pred_fallthru
          _
      $region60: #{tpu_custom_call.1} parent=5 // pred_fallthru
        _
    $region6: #{tpu_custom_call.1} parent=1 // loop_footer
      %s25 = sadd.s32 1, %s21
    $region7: #{tpu_custom_call.1} parent=1 // loop_footer_branch
      %20 = sbr.rel target = $region3
    $region8: #{tpu_custom_call.1} parent=1 // loop_exit
      _
    %737 = vsyncpa [#allocation4], 1
    %s738 = scalar_lea.sflag [#allocation4], 1
    %739 = vsyncpa %s738, 1
    %740 = vsyncpa [#allocation5], 1
    %s741 = scalar_lea.sflag [#allocation5], 1
    %742 = vsyncpa %s741, 1

</llo_original>
